<compile_context>
chip_gen: v5e
topology: v5e:2x2
jax: 0.10.0
libtpu: 0.0.40
codegen_flags: <defaults>
</compile_context>

<pallas_src>
from functools import partial

import jax
import jax.numpy as jnp
from jax.experimental import pallas as pl
from jax.experimental.pallas import tpu as pltpu


def _ceil_div(a, b):
    return -(-a // b)


# ---------------------------------------------------------------------------
# Fused kernel: BatchNorm bias add + T-step signed integrate-and-fire dynamics
# ---------------------------------------------------------------------------
def bn_spiking_kernel(y_ref, b_ref, o_ref, *, T, shared_drive, threshold):
    """y_ref: (1, T_in, tq, 128) conv output (BN scale folded into the weights);
              T_in == 1 on the shared-drive (is_first) path, else T_in == T.
       b_ref: (tq, 128)          per-element BN bias (beta - mean*gamma/sqrt(var+eps))
       o_ref: (1, T, tq, 128)    spike_train * threshold
    """
    bias = b_ref[...]
    drive0 = y_ref[0, 0] + bias                      # reused every dt when shared
    mem = jnp.full(bias.shape, 0.5 * threshold, jnp.float32)   # membrane init
    ssum = jnp.zeros(bias.shape, jnp.float32)                   # sum_spikes
    for dt in range(T):                               # T small & static -> unrolled
        x = drive0 if (shared_drive or dt == 0) else (y_ref[0, dt] + bias)
        mem = mem + x
        sp = (mem >= threshold).astype(jnp.float32)
        mem = mem - sp * threshold
        ssum = ssum + sp
        # sign=True branch: negative-membrane inhibition (emits a -1 "spike")
        inh = jnp.logical_and(mem <= -0.001, ssum > 0).astype(jnp.float32)
        mem = mem + inh * threshold
        ssum = ssum - inh
        o_ref[0, dt] = (sp - inh) * threshold


# ---------------------------------------------------------------------------
# Conv3x3 (pad=1, bias=False) with BN scale folded into the weights
# ---------------------------------------------------------------------------
def _conv_bn(x, conv_w, bn_gamma, bn_beta, bn_mean, bn_var, eps=1e-5):
    """x: [B, Cin, H, W] -> y: [B, Cout, H, W] (f32), bias: [Cout] (f32)."""
    inv_std = bn_gamma / jnp.sqrt(bn_var + eps)
    w_scaled = (conv_w * inv_std[:, None, None, None]).astype(jnp.bfloat16)
    bias = (bn_beta - bn_mean * inv_std).astype(jnp.float32)
    y = jax.lax.conv_general_dilated(
        x.astype(jnp.bfloat16), w_scaled,
        window_strides=(1, 1), padding=((1, 1), (1, 1)),
        dimension_numbers=("NCHW", "OIHW", "NCHW"),
        preferred_element_type=jnp.float32)
    return y, bias


def _prepare_drive(x, conv_w, bn_gamma, bn_beta, bn_mean, bn_var,
                   *, T, is_first, eps=1e-5):
    """Lane-dense conv drive [N, T_in, Q, 128] + bias map [Q, 128] + shape info."""
    if is_first:
        N, Cin, H, W = x.shape
        xc, T_in = x, 1
    else:
        N, Tx, Cin, H, W = x.shape
        assert Tx == T, "time dimension of x must equal T"
        xc, T_in = x.reshape(N * T, Cin, H, W), T
    Cout = conv_w.shape[0]
    y, bias = _conv_bn(xc, conv_w, bn_gamma, bn_beta, bn_mean, bn_var, eps)

    P = Cout * H * W
    Q = _ceil_div(P, 128)
    pad = Q * 128 - P
    y_flat = y.reshape(N, T_in, P)                       # contiguous NCHW flatten
    bias_flat = jnp.broadcast_to(bias[:, None], (Cout, H * W)).reshape(P)
    if pad:
        y_flat = jnp.pad(y_flat, ((0, 0), (0, 0), (0, pad)))
        bias_flat = jnp.pad(bias_flat, ((0, pad),))
    return (y_flat.reshape(N, T_in, Q, 128),
            bias_flat.reshape(Q, 128),
            (N, Cout, H, W, P))


# ---------------------------------------------------------------------------
# Pallas stage: tiling plan + pallas_call
# ---------------------------------------------------------------------------
def _plan_tiles(Q, T, T_in, vmem_budget=8 << 20):
    # f32 [*,128] rows live in VMEM per tq-row: 2x double-buffered output (T),
    # 2x input (T_in), 2x bias, ~4 live temporaries (drive/mem/ssum/spike).
    bytes_per_row = 512 * (2 * T + 2 * T_in + 2 + 4)
    cap = max(8, (vmem_budget // bytes_per_row) // 8 * 8)
    n_tiles = _ceil_div(Q, cap)
    tq = _ceil_div(_ceil_div(Q, n_tiles), 8) * 8
    return tq, n_tiles * tq                               # (tile rows, padded Q)


def _spiking_pallas(y_q, bias_map, *, T, threshold):
    N, T_in, Q, _ = y_q.shape
    tq, Qp = _plan_tiles(Q, T, T_in)
    if Qp != Q:
        y_q = jnp.pad(y_q, ((0, 0), (0, 0), (0, Qp - Q), (0, 0)))
        bias_map = jnp.pad(bias_map, ((0, Qp - Q), (0, 0)))
    shared = (T_in == 1)
    return pl.pallas_call(
        partial(bn_spiking_kernel, T=int(T), shared_drive=shared,
                threshold=float(threshold)),
        out_shape=jax.ShapeDtypeStruct((N, T, Qp, 128), jnp.float32),
        # q (tiles) leads and n varies fastest: the bias tile's block index is
        # unchanged across consecutive n, so its DMA is elided (read once).
        grid=(Qp // tq, N),
        in_specs=[
            pl.BlockSpec((1, T_in, tq, 128), lambda q, n: (n, 0, q, 0)),
            pl.BlockSpec((tq, 128), lambda q, n: (q, 0)),
        ],
        out_specs=pl.BlockSpec((1, T, tq, 128), lambda q, n: (n, 0, q, 0)),
        compiler_params=pltpu.CompilerParams(
            dimension_semantics=("parallel", "parallel")),
    )(y_q, bias_map)


# ---------------------------------------------------------------------------
# Full forward of the PyTorch `Spiking` module (sign=True, idem=False)
# ---------------------------------------------------------------------------
def spiking_forward(x, conv_w, bn_gamma, bn_beta, bn_mean, bn_var,
                    *, T, threshold, is_first=True, eps=1e-5):
    """is_first=True : x is [N, Cin, H, W]    (identical drive every timestep)
       is_first=False: x is [N, T, Cin, H, W] (per-timestep drive, module default)
       Returns spike_train * threshold with shape [N, T, Cout, H, W]."""
    # TODO(synk): block[2] (act_alpha activation) only contributes its threshold
    # here; its clamp is assumed replaced by the IF dynamics (ANN->SNN conversion),
    # so only Conv+BN precede the spiking loop.
    y_q, bias_map, (N, Cout, H, W, P) = _prepare_drive(
        x, conv_w, bn_gamma, bn_beta, bn_mean, bn_var,
        T=T, is_first=is_first, eps=eps)
    spikes = _spiking_pallas(y_q, bias_map, T=T, threshold=threshold)
    spikes = spikes.reshape(N, T, -1)[:, :, :P]           # drop lane padding
    return spikes.reshape(N, T, Cout, H, W)               # contiguous reshape


# Pure-JAX reference of the Pallas stage (same math, same inputs) for checking.
def _spiking_reference(y_q, bias_map, *, T, threshold):
    x = y_q + bias_map[None, None]
    if x.shape[1] == 1:
        x = jnp.broadcast_to(x, (x.shape[0], T) + x.shape[2:])
    mem = jnp.full(x.shape[:1] + x.shape[2:], 0.5 * threshold, jnp.float32)
    ssum = jnp.zeros_like(mem)
    outs = []
    for dt in range(T):
        mem = mem + x[:, dt]
        sp = (mem >= threshold).astype(jnp.float32)
        mem = mem - sp * threshold
        ssum = ssum + sp
        inh = jnp.logical_and(mem <= -0.001, ssum > 0).astype(jnp.float32)
        mem = mem + inh * threshold
        ssum = ssum - inh
        outs.append((sp - inh) * threshold)
    return jnp.stack(outs, axis=1)


if __name__ == "__main__":
    N, Cin, H, W, Cout, T = 2, 4, 16, 16, 8, 4
    threshold = 0.75   # block[2].act_alpha.data (deterministic synthetic value)

    key = jax.random.PRNGKey(0)
    k1, k2, k3 = jax.random.split(key, 3)
    x4 = jax.random.normal(k1, (N, Cin, H, W), jnp.float32)        # is_first path
    x5 = jax.random.normal(k3, (N, T, Cin, H, W), jnp.float32)     # default path
    conv_w = jax.random.normal(k2, (Cout, Cin, 3, 3), jnp.float32) * 0.2
    bn_gamma = jnp.linspace(0.8, 1.2, Cout, dtype=jnp.float32)
    bn_beta = jnp.linspace(-0.1, 0.1, Cout, dtype=jnp.float32)
    bn_mean = jnp.linspace(-0.05, 0.05, Cout, dtype=jnp.float32)
    bn_var = jnp.linspace(0.5, 1.5, Cout, dtype=jnp.float32)

    fwd = jax.jit(spiking_forward, static_argnames=("T", "threshold", "is_first"))

    for xin, is_first in ((x4, True), (x5, False)):
        out = jax.block_until_ready(
            fwd(xin, conv_w, bn_gamma, bn_beta, bn_mean, bn_var,
                T=T, threshold=threshold, is_first=is_first))
        assert out.shape == (N, T, Cout, H, W)
        # spike_train * threshold only takes values in {-threshold, 0, +threshold}
        is_spike = jnp.abs(jnp.abs(out) - threshold) < 1e-6
        is_zero = jnp.abs(out) < 1e-6
        assert bool(jnp.all(is_spike | is_zero))

        # Validate the Pallas BN+spiking stage against a pure-JAX reference on
        # the exact same conv output tensor.
        y_q, bias_map, _ = _prepare_drive(
            xin, conv_w, bn_gamma, bn_beta, bn_mean, bn_var,
            T=T, is_first=is_first)
        pal = jax.block_until_ready(
            _spiking_pallas(y_q, bias_map, T=T, threshold=threshold))
        ref = _spiking_reference(y_q, bias_map, T=T, threshold=threshold)
        Q = y_q.shape[2]
        assert bool(jnp.all(jnp.abs(pal[:, :, :Q] - ref) < 1e-5))

    print("KERNEL_OK")
</pallas_src>

<mosaic_0001>
module attributes {stable_mosaic.version = 11 : i64} {
  func.func @bn_spiking_kernel(%arg0: i32, %arg1: i32, %arg2: memref<1x1x16x128xf32, #tpu.memory_space<vmem>>, %arg3: memref<16x128xf32, #tpu.memory_space<vmem>>, %arg4: memref<1x4x16x128xf32, #tpu.memory_space<vmem>>) attributes {dimension_semantics = [#tpu.dimension_semantics<parallel>, #tpu.dimension_semantics<parallel>], iteration_bounds = array<i64: 1, 2>, scalar_prefetch = 0 : i64, scratch_operands = 0 : i64, tpu.core_type = #tpu.core_type<tc>, window_params = [{transform_indices = @transform_0, window_bounds = array<i64: 1, 1, 16, 128>}, {transform_indices = @transform_1, window_bounds = array<i64: 16, 128>}, {transform_indices = @transform_2, window_bounds = array<i64: 1, 4, 16, 128>}]} {
    %c0 = arith.constant 0 : index
    %c0_0 = arith.constant 0 : index
    %0 = vector.load %arg3[%c0, %c0_0] : memref<16x128xf32, #tpu.memory_space<vmem>>, vector<16x128xf32>
    %c0_1 = arith.constant 0 : index
    %c0_2 = arith.constant 0 : index
    %c0_3 = arith.constant 0 : index
    %c0_4 = arith.constant 0 : index
    %1 = vector.load %arg2[%c0_1, %c0_2, %c0_3, %c0_4] : memref<1x1x16x128xf32, #tpu.memory_space<vmem>>, vector<1x1x16x128xf32>
    %2 = vector.shape_cast %1 : vector<1x1x16x128xf32> to vector<16x128xf32>
    %3 = arith.addf %2, %0 : vector<16x128xf32>
    %cst = arith.constant 3.750000e-01 : f32
    %4 = vector.broadcast %cst : f32 to vector<16x128xf32>
    %cst_5 = arith.constant 0.000000e+00 : f32
    %5 = vector.broadcast %cst_5 : f32 to vector<16x128xf32>
    %6 = arith.addf %4, %3 : vector<16x128xf32>
    %cst_6 = arith.constant 7.500000e-01 : f32
    %7 = vector.broadcast %cst_6 : f32 to vector<16x128xf32>
    %8 = arith.cmpf oge, %6, %7 : vector<16x128xf32>
    %9 = arith.extui %8 : vector<16x128xi1> to vector<16x128xi32>
    %10 = arith.sitofp %9 : vector<16x128xi32> to vector<16x128xf32>
    %cst_7 = arith.constant 7.500000e-01 : f32
    %11 = vector.broadcast %cst_7 : f32 to vector<16x128xf32>
    %12 = arith.mulf %10, %11 : vector<16x128xf32>
    %13 = arith.subf %6, %12 : vector<16x128xf32>
    %14 = arith.addf %5, %10 : vector<16x128xf32>
    %cst_8 = arith.constant -1.000000e-03 : f32
    %15 = vector.broadcast %cst_8 : f32 to vector<16x128xf32>
    %16 = arith.cmpf ole, %13, %15 : vector<16x128xf32>
    %cst_9 = arith.constant 0.000000e+00 : f32
    %17 = vector.broadcast %cst_9 : f32 to vector<16x128xf32>
    %18 = arith.cmpf ogt, %14, %17 : vector<16x128xf32>
    %19 = arith.andi %16, %18 : vector<16x128xi1>
    %20 = arith.extui %19 : vector<16x128xi1> to vector<16x128xi32>
    %21 = arith.sitofp %20 : vector<16x128xi32> to vector<16x128xf32>
    %cst_10 = arith.constant 7.500000e-01 : f32
    %22 = vector.broadcast %cst_10 : f32 to vector<16x128xf32>
    %23 = arith.mulf %21, %22 : vector<16x128xf32>
    %24 = arith.addf %13, %23 : vector<16x128xf32>
    %25 = arith.subf %14, %21 : vector<16x128xf32>
    %26 = arith.subf %10, %21 : vector<16x128xf32>
    %cst_11 = arith.constant 7.500000e-01 : f32
    %27 = vector.broadcast %cst_11 : f32 to vector<16x128xf32>
    %28 = arith.mulf %26, %27 : vector<16x128xf32>
    %c0_12 = arith.constant 0 : index
    %c0_13 = arith.constant 0 : index
    %c0_14 = arith.constant 0 : index
    %c0_15 = arith.constant 0 : index
    %29 = vector.load %arg4[%c0_12, %c0_13, %c0_14, %c0_15] : memref<1x4x16x128xf32, #tpu.memory_space<vmem>>, vector<1x1x16x128xf32>
    %30 = vector.shape_cast %29 : vector<1x1x16x128xf32> to vector<16x128xf32>
    %31 = vector.shape_cast %28 : vector<16x128xf32> to vector<1x1x16x128xf32>
    tpu.vector_store %arg4[%c0_12, %c0_13, %c0_14, %c0_15], %31 {strides = array<i32>} : memref<1x4x16x128xf32, #tpu.memory_space<vmem>>, vector<1x1x16x128xf32>,
    %32 = arith.addf %24, %3 : vector<16x128xf32>
    %cst_16 = arith.constant 7.500000e-01 : f32
    %33 = vector.broadcast %cst_16 : f32 to vector<16x128xf32>
    %34 = arith.cmpf oge, %32, %33 : vector<16x128xf32>
    %35 = arith.extui %34 : vector<16x128xi1> to vector<16x128xi32>
    %36 = arith.sitofp %35 : vector<16x128xi32> to vector<16x128xf32>
    %cst_17 = arith.constant 7.500000e-01 : f32
    %37 = vector.broadcast %cst_17 : f32 to vector<16x128xf32>
    %38 = arith.mulf %36, %37 : vector<16x128xf32>
    %39 = arith.subf %32, %38 : vector<16x128xf32>
    %40 = arith.addf %25, %36 : vector<16x128xf32>
    %cst_18 = arith.constant -1.000000e-03 : f32
    %41 = vector.broadcast %cst_18 : f32 to vector<16x128xf32>
    %42 = arith.cmpf ole, %39, %41 : vector<16x128xf32>
    %cst_19 = arith.constant 0.000000e+00 : f32
    %43 = vector.broadcast %cst_19 : f32 to vector<16x128xf32>
    %44 = arith.cmpf ogt, %40, %43 : vector<16x128xf32>
    %45 = arith.andi %42, %44 : vector<16x128xi1>
    %46 = arith.extui %45 : vector<16x128xi1> to vector<16x128xi32>
    %47 = arith.sitofp %46 : vector<16x128xi32> to vector<16x128xf32>
    %cst_20 = arith.constant 7.500000e-01 : f32
    %48 = vector.broadcast %cst_20 : f32 to vector<16x128xf32>
    %49 = arith.mulf %47, %48 : vector<16x128xf32>
    %50 = arith.addf %39, %49 : vector<16x128xf32>
    %51 = arith.subf %40, %47 : vector<16x128xf32>
    %52 = arith.subf %36, %47 : vector<16x128xf32>
    %cst_21 = arith.constant 7.500000e-01 : f32
    %53 = vector.broadcast %cst_21 : f32 to vector<16x128xf32>
    %54 = arith.mulf %52, %53 : vector<16x128xf32>
    %c0_22 = arith.constant 0 : index
    %c1 = arith.constant 1 : index
    %c0_23 = arith.constant 0 : index
    %c0_24 = arith.constant 0 : index
    %55 = vector.load %arg4[%c0_22, %c1, %c0_23, %c0_24] : memref<1x4x16x128xf32, #tpu.memory_space<vmem>>, vector<1x1x16x128xf32>
    %56 = vector.shape_cast %55 : vector<1x1x16x128xf32> to vector<16x128xf32>
    %57 = vector.shape_cast %54 : vector<16x128xf32> to vector<1x1x16x128xf32>
    tpu.vector_store %arg4[%c0_22, %c1, %c0_23, %c0_24], %57 {strides = array<i32>} : memref<1x4x16x128xf32, #tpu.memory_space<vmem>>, vector<1x1x16x128xf32>,
    %58 = arith.addf %50, %3 : vector<16x128xf32>
    %cst_25 = arith.constant 7.500000e-01 : f32
    %59 = vector.broadcast %cst_25 : f32 to vector<16x128xf32>
    %60 = arith.cmpf oge, %58, %59 : vector<16x128xf32>
    %61 = arith.extui %60 : vector<16x128xi1> to vector<16x128xi32>
    %62 = arith.sitofp %61 : vector<16x128xi32> to vector<16x128xf32>
    %cst_26 = arith.constant 7.500000e-01 : f32
    %63 = vector.broadcast %cst_26 : f32 to vector<16x128xf32>
    %64 = arith.mulf %62, %63 : vector<16x128xf32>
    %65 = arith.subf %58, %64 : vector<16x128xf32>
    %66 = arith.addf %51, %62 : vector<16x128xf32>
    %cst_27 = arith.constant -1.000000e-03 : f32
    %67 = vector.broadcast %cst_27 : f32 to vector<16x128xf32>
    %68 = arith.cmpf ole, %65, %67 : vector<16x128xf32>
    %cst_28 = arith.constant 0.000000e+00 : f32
    %69 = vector.broadcast %cst_28 : f32 to vector<16x128xf32>
    %70 = arith.cmpf ogt, %66, %69 : vector<16x128xf32>
    %71 = arith.andi %68, %70 : vector<16x128xi1>
    %72 = arith.extui %71 : vector<16x128xi1> to vector<16x128xi32>
    %73 = arith.sitofp %72 : vector<16x128xi32> to vector<16x128xf32>
    %cst_29 = arith.constant 7.500000e-01 : f32
    %74 = vector.broadcast %cst_29 : f32 to vector<16x128xf32>
    %75 = arith.mulf %73, %74 : vector<16x128xf32>
    %76 = arith.addf %65, %75 : vector<16x128xf32>
    %77 = arith.subf %66, %73 : vector<16x128xf32>
    %78 = arith.subf %62, %73 : vector<16x128xf32>
    %cst_30 = arith.constant 7.500000e-01 : f32
    %79 = vector.broadcast %cst_30 : f32 to vector<16x128xf32>
    %80 = arith.mulf %78, %79 : vector<16x128xf32>
    %c0_31 = arith.constant 0 : index
    %c2 = arith.constant 2 : index
    %c0_32 = arith.constant 0 : index
    %c0_33 = arith.constant 0 : index
    %81 = vector.load %arg4[%c0_31, %c2, %c0_32, %c0_33] : memref<1x4x16x128xf32, #tpu.memory_space<vmem>>, vector<1x1x16x128xf32>
    %82 = vector.shape_cast %81 : vector<1x1x16x128xf32> to vector<16x128xf32>
    %83 = vector.shape_cast %80 : vector<16x128xf32> to vector<1x1x16x128xf32>
    tpu.vector_store %arg4[%c0_31, %c2, %c0_32, %c0_33], %83 {strides = array<i32>} : memref<1x4x16x128xf32, #tpu.memory_space<vmem>>, vector<1x1x16x128xf32>,
    %84 = arith.addf %76, %3 : vector<16x128xf32>
    %cst_34 = arith.constant 7.500000e-01 : f32
    %85 = vector.broadcast %cst_34 : f32 to vector<16x128xf32>
    %86 = arith.cmpf oge, %84, %85 : vector<16x128xf32>
    %87 = arith.extui %86 : vector<16x128xi1> to vector<16x128xi32>
    %88 = arith.sitofp %87 : vector<16x128xi32> to vector<16x128xf32>
    %cst_35 = arith.constant 7.500000e-01 : f32
    %89 = vector.broadcast %cst_35 : f32 to vector<16x128xf32>
    %90 = arith.mulf %88, %89 : vector<16x128xf32>
    %91 = arith.subf %84, %90 : vector<16x128xf32>
    %92 = arith.addf %77, %88 : vector<16x128xf32>
    %cst_36 = arith.constant -1.000000e-03 : f32
    %93 = vector.broadcast %cst_36 : f32 to vector<16x128xf32>
    %94 = arith.cmpf ole, %91, %93 : vector<16x128xf32>
    %cst_37 = arith.constant 0.000000e+00 : f32
    %95 = vector.broadcast %cst_37 : f32 to vector<16x128xf32>
    %96 = arith.cmpf ogt, %92, %95 : vector<16x128xf32>
    %97 = arith.andi %94, %96 : vector<16x128xi1>
    %98 = arith.extui %97 : vector<16x128xi1> to vector<16x128xi32>
    %99 = arith.sitofp %98 : vector<16x128xi32> to vector<16x128xf32>
    %100 = arith.subf %88, %99 : vector<16x128xf32>
    %cst_38 = arith.constant 7.500000e-01 : f32
    %101 = vector.broadcast %cst_38 : f32 to vector<16x128xf32>
    %102 = arith.mulf %100, %101 : vector<16x128xf32>
    %c0_39 = arith.constant 0 : index
    %c3 = arith.constant 3 : index
    %c0_40 = arith.constant 0 : index
    %c0_41 = arith.constant 0 : index
    %103 = vector.load %arg4[%c0_39, %c3, %c0_40, %c0_41] : memref<1x4x16x128xf32, #tpu.memory_space<vmem>>, vector<1x1x16x128xf32>
    %104 = vector.shape_cast %103 : vector<1x1x16x128xf32> to vector<16x128xf32>
    %105 = vector.shape_cast %102 : vector<16x128xf32> to vector<1x1x16x128xf32>
    tpu.vector_store %arg4[%c0_39, %c3, %c0_40, %c0_41], %105 {strides = array<i32>} : memref<1x4x16x128xf32, #tpu.memory_space<vmem>>, vector<1x1x16x128xf32>,
    return
  }
  func.func @transform_0(%arg0: i32, %arg1: i32) -> (i32, i32, i32, i32) {
    %c0_i32 = arith.constant 0 : i32
    %c0_i32_0 = arith.constant 0 : i32
    %c0_i32_1 = arith.constant 0 : i32
    return %arg1, %c0_i32, %arg0, %c0_i32_0 : i32, i32, i32, i32
  }
  func.func @transform_1(%arg0: i32, %arg1: i32) -> (i32, i32) {
    %c0_i32 = arith.constant 0 : i32
    %c0_i32_0 = arith.constant 0 : i32
    return %arg0, %c0_i32 : i32, i32
  }
  func.func @transform_2(%arg0: i32, %arg1: i32) -> (i32, i32, i32, i32) {
    %c0_i32 = arith.constant 0 : i32
    %c0_i32_0 = arith.constant 0 : i32
    %c0_i32_1 = arith.constant 0 : i32
    return %arg1, %c0_i32, %arg0, %c0_i32_0 : i32, i32, i32, i32
  }
}

</mosaic_0001>

<llo_original>
// kernel: spiking_forward.1
$region0: #{spiking_forward.1}
  #allocation0 [shape = 'u32[]', space=smem, size = 0x4, offset = 0x4, fixed_abs, tag = 'smem constant byte address 0x4 - core index']
  #allocation1 [shape = 'u32[72,128]{1,0:T(1,128)}', space=vmem, size = 0x9000, scoped, tag = 'internal scratch']
  %s0 = inlined_call_operand.vmem [shape: f32[2,1,16,128], index: 0, kind: input, shape index: {}]
  %s1 = inlined_call_operand.vmem [shape: f32[16,128], index: 1, kind: input, shape index: {}]
  %s2 = inlined_call_operand.vmem [shape: f32[2,4,16,128], index: 2, kind: output, shape index: {}]
  %s3 = sld [smem:[#allocation0]]
  $region41: #{spiking_forward.1} parent=0
    _
  %s5 = ssub.s32 1, %s3
  %s6 = scalar_select 0, %s5, %s3
  loop: start=0, step=1, limit=4
  $region2: #{spiking_forward.1} parent=0 // loop_pre_header
    _
  $region3: #{spiking_forward.1} parent=0 // loop_header
    %s8 = sphi 0, %s12
    %p9 = scmp.ge.s32.totalorder %s8, 4
    %s15 = sphi 0, %s27
    %s16 = sphi 0, %s23
    %s17 = sphi 0, %s15
    %s18 = sphi 0, %s16
    %s19 = sphi 0, %s17
    %s20 = sphi 0, %s18
    %s32 = sphi 0, %s34
    %s35 = sphi 0, %s32
    %s36 = sphi 0, %s35
    %s52 = sphi 0, %s36
    %s58 = sphi 0, %s60
    %s61 = sphi 0, %s58
    %s62 = sphi 0, %s61
    %s78 = sphi 0, %s62
    %s86 = sphi 0, %s88
    %s89 = sphi 0, %s86
    %s90 = sphi 0, %s89
    %s106 = sphi 0, %s90
  $region4: #{spiking_forward.1} parent=0 // loop_header_branch
    %11 = sbr.rel (%p9) target = $region8
  $region5: #{spiking_forward.1} parent=0 // loop_body
    %s13 = ssub.s32 %s8, 1
    %s14 = ssub.s32 %s8, 2
    %s21 = sadd.s32 1, %s16
    %p22 = scmp.ge.s32.totalorder %s21, 2
    %s23 = scalar_select %p22, 0, %s21
    %s24 = sadd.s32 1, %s15
    %s25 = scalar_select %p22, %s24, %s15
    %p26 = scmp.ge.s32.totalorder %s25, 1
    %s27 = scalar_select %p26, 0, %s25
    %s28 = ssub.s32 %s16, %s23
    %s29 = ssub.s32 %s15, %s27
    %s30 = sor.u32 %s28, %s29
    %p31 = scmp.eq.s32.totalorder %s30, 0
    %s33 = sadd.s32 %s32, 1
    %s34 = scalar_select %p31, %s32, %s33
    %p37 = pneg %p31
    %p38 = scmp.eq.s32.totalorder %s8, 1
    %p39 = por %p37, %p38
    %p40 = scmp.ne.s32.totalorder %s32, %s35
    %p41 = scmp.eq.s32.totalorder %s8, 0
    %p42 = por %p40, %p41
    %p43 = scmp.ne.s32.totalorder %s32, %s35
    %p44 = scmp.eq.s32.totalorder %s13, 1
    %p45 = por %p43, %p44
    %p46 = scmp.ne.s32.totalorder %s35, %s36
    %p47 = scmp.eq.s32.totalorder %s13, 0
    %p48 = por %p46, %p47
    %p49 = scmp.ne.s32.totalorder %s35, %s36
    %p50 = scmp.eq.s32.totalorder %s14, 1
    %p51 = por %p49, %p50
    %p53 = scmp.ne.s32.totalorder %s36, %s52
    %p54 = scmp.eq.s32.totalorder %s14, 0
    %p55 = por %p53, %p54
    %s56 = ssub.s32 %s15, %s27
    %p57 = scmp.eq.s32.totalorder %s56, 0
    %s59 = sadd.s32 %s58, 1
    %s60 = scalar_select %p57, %s58, %s59
    %p63 = pneg %p57
    %p64 = scmp.eq.s32.totalorder %s8, 1
    %p65 = por %p63, %p64
    %p66 = scmp.ne.s32.totalorder %s58, %s61
    %p67 = scmp.eq.s32.totalorder %s8, 0
    %p68 = por %p66, %p67
    %p69 = scmp.ne.s32.totalorder %s58, %s61
    %p70 = scmp.eq.s32.totalorder %s13, 1
    %p71 = por %p69, %p70
    %p72 = scmp.ne.s32.totalorder %s61, %s62
    %p73 = scmp.eq.s32.totalorder %s13, 0
    %p74 = por %p72, %p73
    %p75 = scmp.ne.s32.totalorder %s61, %s62
    %p76 = scmp.eq.s32.totalorder %s14, 1
    %p77 = por %p75, %p76
    %p79 = scmp.ne.s32.totalorder %s62, %s78
    %p80 = scmp.eq.s32.totalorder %s14, 0
    %p81 = por %p79, %p80
    %s82 = ssub.s32 %s16, %s23
    %s83 = ssub.s32 %s15, %s27
    %s84 = sor.u32 %s82, %s83
    %p85 = scmp.eq.s32.totalorder %s84, 0
    %s87 = sadd.s32 %s86, 1
    %s88 = scalar_select %p85, %s86, %s87
    %p91 = pneg %p85
    %p92 = scmp.eq.s32.totalorder %s8, 1
    %p93 = por %p91, %p92
    %p94 = scmp.ne.s32.totalorder %s86, %s89
    %p95 = scmp.eq.s32.totalorder %s8, 0
    %p96 = por %p94, %p95
    %p97 = scmp.ne.s32.totalorder %s86, %s89
    %p98 = scmp.eq.s32.totalorder %s13, 1
    %p99 = por %p97, %p98
    %p100 = scmp.ne.s32.totalorder %s89, %s90
    %p101 = scmp.eq.s32.totalorder %s13, 0
    %p102 = por %p100, %p101
    %p103 = scmp.ne.s32.totalorder %s89, %s90
    %p104 = scmp.eq.s32.totalorder %s14, 1
    %p105 = por %p103, %p104
    %p107 = scmp.ne.s32.totalorder %s90, %s106
    %p108 = scmp.eq.s32.totalorder %s14, 0
    %p109 = por %p107, %p108
    %p110 = scmp.le.s32.totalorder 1, %s8
    %p111 = scmp.lt.s32.totalorder %s8, 3
    %p112 = pnand %p110, %p111
    %p113 = pneg %p112
    // Predicated region
    $region9: #{spiking_forward.1} parent=5 // pred_check
      _
    $region10: #{spiking_forward.1} parent=5 // pred_check_branch
      %115 = sbr.rel (%p112) target = $region12
    $region11: #{spiking_forward.1} parent=5 // pred_region
      %s116 = ssub.s32 %s8, 1
      // Predicated region
      $region13: #{spiking_forward.1} parent=11 // pred_check
        %p117 = pneg %p74
      $region14: #{spiking_forward.1} parent=11 // pred_check_branch
        %119 = sbr.rel (%p117) target = $region16
      $region15: #{spiking_forward.1} parent=11 // pred_region
        %s120 = smul.u32 2, %s17
        %p121 = scmp.lt.s32.totalorder %s120, 1
        %s122 = scalar_select %p121, %s120, 1
        %s123 = smul.addr %s122, 8
        %s124 = scalar_lea.vmem %s1, %s123
        %s125 = smul.u32 2, %s17
      $region16: #{spiking_forward.1} parent=11 // pred_fallthru
        _
    $region12: #{spiking_forward.1} parent=5 // pred_fallthru
      _
    %p126 = scmp.lt.s32.totalorder %s8, 2
    // Predicated region
    $region17: #{spiking_forward.1} parent=5 // pred_check
      %p127 = pneg %p126
    $region18: #{spiking_forward.1} parent=5 // pred_check_branch
      %129 = sbr.rel (%p127) target = $region20
    $region19: #{spiking_forward.1} parent=5 // pred_region
      // Predicated region
      $region21: #{spiking_forward.1} parent=19 // pred_check
        %p130 = pneg %p42
      $region22: #{spiking_forward.1} parent=19 // pred_check_branch
        %132 = sbr.rel (%p130) target = $region24
      $region23: #{spiking_forward.1} parent=19 // pred_region
        %s133 = smul.u32 2, %s15
        %p134 = scmp.lt.s32.totalorder %s16, 1
        %s135 = scalar_select %p134, %s16, 1
        %p136 = scmp.lt.s32.totalorder %s133, 1
        %s137 = scalar_select %p136, %s133, 1
        %s138 = smul.addr %s135, 2
        %s139 = sadd.s32 %s137, %s138
        %s140 = smul.addr %s139, 8
        %s141 = scalar_lea.vmem %s0, %s140
        %s142 = smul.u32 2, %s15
      $region24: #{spiking_forward.1} parent=19 // pred_fallthru
        _
    $region20: #{spiking_forward.1} parent=5 // pred_fallthru
      _
    %p143 = scmp.le.s32.totalorder 1, %s8
    %p144 = scmp.lt.s32.totalorder %s8, 3
    %p145 = pnand %p143, %p144
    %p146 = pneg %p145
    // Predicated region
    $region25: #{spiking_forward.1} parent=5 // pred_check
      _
    $region26: #{spiking_forward.1} parent=5 // pred_check_branch
      %148 = sbr.rel (%p145) target = $region28
    $region27: #{spiking_forward.1} parent=5 // pred_region
      %s149 = ssub.s32 %s8, 1
      %s150 = smul.u32 2, %s17
      %p151 = scmp.lt.s32.totalorder %s18, 1
      %s152 = scalar_select %p151, %s18, 1
      %p153 = scmp.lt.s32.totalorder %s150, 1
      %s154 = scalar_select %p153, %s150, 1
      %s155 = smul.addr %s152, 2
      %s156 = sadd.s32 %s154, %s155
      %s157 = smul.addr %s156, 8
      %s158 = scalar_lea.vmem %s0, %s157
      %p159 = pneg %p48
      %p160 = pneg %p45
      %s161 = smul.u32 2, %s17
      %p162 = scmp.lt.s32.totalorder %s161, 1
      %s163 = scalar_select %p162, %s161, 1
      %s164 = smul.addr %s163, 8
      %s165 = scalar_lea.vmem %s1, %s164
      %p166 = pneg %p74
      %p167 = pneg %p71
      %p168 = pneg %p102
      %p169 = pneg %p99
      %s170 = smul.u32 2, %s17
      %p171 = scmp.lt.s32.totalorder %s18, 1
      %s172 = scalar_select %p171, %s18, 1
      %p173 = scmp.lt.s32.totalorder %s170, 1
      %s174 = scalar_select %p173, %s170, 1
      %s175 = smul.addr %s172, 8
      %s176 = sadd.s32 %s174, %s175
      %s177 = smul.addr %s176, 8
      %s178 = scalar_lea.vmem %s2, %s177
      %s179 = smul.u32 2, %s17
      %p180 = scmp.lt.s32.totalorder %s18, 1
      %s181 = scalar_select %p180, %s18, 1
      %p182 = scmp.lt.s32.totalorder %s179, 1
      %s183 = scalar_select %p182, %s179, 1
      %s184 = smul.addr %s181, 2
      %s185 = sadd.s32 %s183, %s184
      %s186 = smul.addr %s185, 8
      %s187 = scalar_lea.vmem %s0, %s186
      %s188 = smul.u32 2, %s17
      %s189 = smul.u32 2, %s17
      %p190 = scmp.lt.s32.totalorder %s189, 1
      %s191 = scalar_select %p190, %s189, 1
      %s192 = smul.addr %s191, 8
      %s193 = scalar_lea.vmem %s1, %s192
      %s194 = smul.u32 2, %s17
      %s195 = smul.u32 2, %s17
      %p196 = scmp.lt.s32.totalorder %s18, 1
      %s197 = scalar_select %p196, %s18, 1
      %p198 = scmp.lt.s32.totalorder %s195, 1
      %s199 = scalar_select %p198, %s195, 1
      %s200 = smul.addr %s197, 8
      %s201 = sadd.s32 %s199, %s200
      %s202 = smul.addr %s201, 8
      %s203 = scalar_lea.vmem %s2, %s202
      %s204 = smul.u32 2, %s17
      %v205 = vld [vmem:[%s193] sm:$0xff]
      %v206 = vld [vmem:[%s193 + $0x8] sm:$0xff]
      %v207 = vld [vmem:[%s187] sm:$0xff]
      %v208 = vld [vmem:[%s187 + $0x8] sm:$0xff]
      %v209 = vadd.f32 %v207, %v205
      %v210 = vadd.f32 %v208, %v206
      %v211 = vadd.f32 %v209, 0.375
      %v212 = vadd.f32 %v210, 0.375
      %vm213 = vcmp.ge.f32.partialorder %v211, 0.75
      %vm214 = vcmp.ge.f32.partialorder %v212, 0.75
      %v215 = vsel %vm213, 1, 0
      %v216 = vsel %vm214, 1, 0
      %v217 = vcvt.s32.f32 %v215
      %v218 = vcvt.s32.f32 %v216
      %v219 = vmul.f32 %v217, 0.75
      %v220 = vmul.f32 %v218, 0.75
      %v221 = vsub.f32 %v211, %v219
      %v222 = vsub.f32 %v212, %v220
      %v223 = vadd.f32 %v217, 0.0
      %v224 = vadd.f32 %v218, 0.0
      %vm225 = vcmp.le.f32.partialorder %v221, -0.001
      %vm226 = vcmp.le.f32.partialorder %v222, -0.001
      %vm227 = vcmp.gt.f32.partialorder %v223, 0.0
      %vm228 = vcmp.gt.f32.partialorder %v224, 0.0
      %vm229 = vmand %vm225, %vm227
      %vm230 = vmand %vm226, %vm228
      %v231 = vsel %vm229, 1, 0
      %v232 = vsel %vm230, 1, 0
      %v233 = vcvt.s32.f32 %v231
      %v234 = vcvt.s32.f32 %v232
      %v235 = vmul.f32 %v233, 0.75
      %v236 = vmul.f32 %v234, 0.75
      %v237 = vadd.f32 %v221, %v235
      %v238 = vadd.f32 %v222, %v236
      %v239 = vsub.f32 %v223, %v233
      %v240 = vsub.f32 %v224, %v234
      %v241 = vsub.f32 %v217, %v233
      %v242 = vsub.f32 %v218, %v234
      %v243 = vmul.f32 %v241, 0.75
      %v244 = vmul.f32 %v242, 0.75
      %245 = vst [vmem:[%s203] sm:$0xff] %v243
      %246 = vst [vmem:[%s203 + $0x8] sm:$0xff] %v244
      %v247 = vadd.f32 %v237, %v209
      %v248 = vadd.f32 %v238, %v210
      %vm249 = vcmp.ge.f32.partialorder %v247, 0.75
      %vm250 = vcmp.ge.f32.partialorder %v248, 0.75
      %v251 = vsel %vm249, 1, 0
      %v252 = vsel %vm250, 1, 0
      %v253 = vcvt.s32.f32 %v251
      %v254 = vcvt.s32.f32 %v252
      %v255 = vmul.f32 %v253, 0.75
      %v256 = vmul.f32 %v254, 0.75
      %v257 = vsub.f32 %v247, %v255
      %v258 = vsub.f32 %v248, %v256
      %v259 = vadd.f32 %v239, %v253
      %v260 = vadd.f32 %v240, %v254
      %vm261 = vcmp.le.f32.partialorder %v257, -0.001
      %vm262 = vcmp.le.f32.partialorder %v258, -0.001
      %vm263 = vcmp.gt.f32.partialorder %v259, 0.0
      %vm264 = vcmp.gt.f32.partialorder %v260, 0.0
      %vm265 = vmand %vm261, %vm263
      %vm266 = vmand %vm262, %vm264
      %v267 = vsel %vm265, 1, 0
      %v268 = vsel %vm266, 1, 0
      %v269 = vcvt.s32.f32 %v267
      %v270 = vcvt.s32.f32 %v268
      %v271 = vmul.f32 %v269, 0.75
      %v272 = vmul.f32 %v270, 0.75
      %v273 = vadd.f32 %v257, %v271
      %v274 = vadd.f32 %v258, %v272
      %v275 = vsub.f32 %v259, %v269
      %v276 = vsub.f32 %v260, %v270
      %v277 = vsub.f32 %v253, %v269
      %v278 = vsub.f32 %v254, %v270
      %v279 = vmul.f32 %v277, 0.75
      %v280 = vmul.f32 %v278, 0.75
      %s281 = scalar_lea.vmem %s203, 16
      %282 = vst [vmem:[%s281] sm:$0xff] %v279
      %283 = vst [vmem:[%s281 + $0x8] sm:$0xff] %v280
      %v284 = vadd.f32 %v273, %v209
      %v285 = vadd.f32 %v274, %v210
      %vm286 = vcmp.ge.f32.partialorder %v284, 0.75
      %vm287 = vcmp.ge.f32.partialorder %v285, 0.75
      %v288 = vsel %vm286, 1, 0
      %v289 = vsel %vm287, 1, 0
      %v290 = vcvt.s32.f32 %v288
      %v291 = vcvt.s32.f32 %v289
      %v292 = vmul.f32 %v290, 0.75
      %v293 = vmul.f32 %v291, 0.75
      %v294 = vsub.f32 %v284, %v292
      %v295 = vsub.f32 %v285, %v293
      %v296 = vadd.f32 %v275, %v290
      %v297 = vadd.f32 %v276, %v291
      %vm298 = vcmp.le.f32.partialorder %v294, -0.001
      %vm299 = vcmp.le.f32.partialorder %v295, -0.001
      %vm300 = vcmp.gt.f32.partialorder %v296, 0.0
      %vm301 = vcmp.gt.f32.partialorder %v297, 0.0
      %vm302 = vmand %vm298, %vm300
      %vm303 = vmand %vm299, %vm301
      %v304 = vsel %vm302, 1, 0
      %v305 = vsel %vm303, 1, 0
      %v306 = vcvt.s32.f32 %v304
      %v307 = vcvt.s32.f32 %v305
      %v308 = vmul.f32 %v306, 0.75
      %v309 = vmul.f32 %v307, 0.75
      %v310 = vadd.f32 %v294, %v308
      %v311 = vadd.f32 %v295, %v309
      %v312 = vsub.f32 %v296, %v306
      %v313 = vsub.f32 %v297, %v307
      %v314 = vsub.f32 %v290, %v306
      %v315 = vsub.f32 %v291, %v307
      %v316 = vmul.f32 %v314, 0.75
      %v317 = vmul.f32 %v315, 0.75
      %s318 = scalar_lea.vmem %s203, 32
      %319 = vst [vmem:[%s318] sm:$0xff] %v316
      %320 = vst [vmem:[%s318 + $0x8] sm:$0xff] %v317
      %v321 = vadd.f32 %v310, %v209
      %v322 = vadd.f32 %v311, %v210
      %vm323 = vcmp.ge.f32.partialorder %v321, 0.75
      %vm324 = vcmp.ge.f32.partialorder %v322, 0.75
      %v325 = vsel %vm323, 1, 0
      %v326 = vsel %vm324, 1, 0
      %v327 = vcvt.s32.f32 %v325
      %v328 = vcvt.s32.f32 %v326
      %v329 = vmul.f32 %v327, 0.75
      %v330 = vmul.f32 %v328, 0.75
      %v331 = vsub.f32 %v321, %v329
      %v332 = vsub.f32 %v322, %v330
      %v333 = vadd.f32 %v312, %v327
      %v334 = vadd.f32 %v313, %v328
      %vm335 = vcmp.le.f32.partialorder %v331, -0.001
      %vm336 = vcmp.le.f32.partialorder %v332, -0.001
      %vm337 = vcmp.gt.f32.partialorder %v333, 0.0
      %vm338 = vcmp.gt.f32.partialorder %v334, 0.0
      %vm339 = vmand %vm335, %vm337
      %vm340 = vmand %vm336, %vm338
      %v341 = vsel %vm339, 1, 0
      %v342 = vsel %vm340, 1, 0
      %v343 = vcvt.s32.f32 %v341
      %v344 = vcvt.s32.f32 %v342
      %v345 = vsub.f32 %v327, %v343
      %v346 = vsub.f32 %v328, %v344
      %v347 = vmul.f32 %v345, 0.75
      %v348 = vmul.f32 %v346, 0.75
      %s349 = scalar_lea.vmem %s203, 48
      %350 = vst [vmem:[%s349] sm:$0xff] %v347
      %351 = vst [vmem:[%s349 + $0x8] sm:$0xff] %v348
      %s352 = smul.u32 2, %s17
      %p353 = scmp.lt.s32.totalorder %s18, 1
      %s354 = scalar_select %p353, %s18, 1
      %p355 = scmp.lt.s32.totalorder %s352, 1
      %s356 = scalar_select %p355, %s352, 1
      %s357 = smul.addr %s354, 8
      %s358 = sadd.s32 %s356, %s357
      %s359 = smul.addr %s358, 8
      %s360 = scalar_lea.vmem %s2, %s359
      // Predicated region
      $region29: #{spiking_forward.1} parent=27 // pred_check
        %p361 = pneg %p99
      $region30: #{spiking_forward.1} parent=27 // pred_check_branch
        %363 = sbr.rel (%p361) target = $region32
      $region31: #{spiking_forward.1} parent=27 // pred_region
        %s364 = smul.u32 2, %s17
      $region32: #{spiking_forward.1} parent=27 // pred_fallthru
        _
    $region28: #{spiking_forward.1} parent=5 // pred_fallthru
      _
    %p365 = scmp.le.s32.totalorder 2, %s8
    // Predicated region
    $region33: #{spiking_forward.1} parent=5 // pred_check
      %p366 = pneg %p365
    $region34: #{spiking_forward.1} parent=5 // pred_check_branch
      %368 = sbr.rel (%p366) target = $region36
    $region35: #{spiking_forward.1} parent=5 // pred_region
      %s369 = ssub.s32 %s8, 2
      // Predicated region
      $region37: #{spiking_forward.1} parent=35 // pred_check
        %p370 = pneg %p105
      $region38: #{spiking_forward.1} parent=35 // pred_check_branch
        %372 = sbr.rel (%p370) target = $region40
      $region39: #{spiking_forward.1} parent=35 // pred_region
        %s373 = smul.u32 2, %s19
        %p374 = scmp.lt.s32.totalorder %s20, 1
        %s375 = scalar_select %p374, %s20, 1
        %p376 = scmp.lt.s32.totalorder %s373, 1
        %s377 = scalar_select %p376, %s373, 1
        %s378 = smul.addr %s375, 8
        %s379 = sadd.s32 %s377, %s378
        %s380 = smul.addr %s379, 8
        %s381 = scalar_lea.vmem %s2, %s380
      $region40: #{spiking_forward.1} parent=35 // pred_fallthru
        _
    $region36: #{spiking_forward.1} parent=5 // pred_fallthru
      _
  $region6: #{spiking_forward.1} parent=0 // loop_footer
    %s12 = sadd.s32 1, %s8
  $region7: #{spiking_forward.1} parent=0 // loop_footer_branch
    %7 = sbr.rel target = $region3
  $region8: #{spiking_forward.1} parent=0 // loop_exit
    _

</llo_original>
